<compile_context>
chip_gen: v7x
topology: tpu7x:2x2x1
jax: 0.10.0
libtpu: 0.0.40
codegen_flags: <defaults>
</compile_context>

<pallas_src>
import functools

import jax
import jax.numpy as jnp
from jax.experimental import pallas as pl
from jax.experimental.pallas import tpu as pltpu

_LANES = 128


def _vmem_capacity_bytes():
    """Per-core VMEM (64 MiB v7x, 128 MiB v5e/v6e); conservative default."""
    try:
        cap = getattr(pltpu.get_tpu_info(), "vmem_capacity_bytes", None)
        if cap:
            return int(cap)
    except Exception:
        pass
    return 64 * 1024 * 1024


def _pick_row_tile(n_rows, per_row_bytes, budget_bytes):
    """Largest row tile (multiple of 16, bf16-safe) fitting the VMEM budget,
    capped so the grid has >= 2 steps when there is enough work (keeps the DMA
    pipeline and both v7x TensorCores busy).  The grid uses ceiling division,
    so non-dividing tiles are fine (Pallas masks the partial last block)."""
    if n_rows <= 16:
        return n_rows
    max_rows = max(16, (budget_bytes // max(per_row_bytes, 1)) // 16 * 16)
    half = ((n_rows + 1) // 2 + 15) // 16 * 16
    return min(half, max_rows)


def _expansion_matrix(n_conc, spr, dtype):
    """(spr*4, 4*_LANES) 0/1 matrix E with E[g*4+k, k*_LANES + lane] = 1 iff
    lane // n_conc == g.  Multiplying a packed per-row parameter block
    (rows of [s0:B1..B4, s1:B1..B4, ...]) by E broadcasts parameter k of the
    sample owning each lane into lane range [k*_LANES, (k+1)*_LANES)."""
    lane = jnp.arange(4 * _LANES, dtype=jnp.int32)
    k = lane // _LANES
    g = (lane % _LANES) // n_conc
    src = g * 4 + k
    return (jnp.arange(spr * 4, dtype=jnp.int32)[:, None]
            == src[None, :]).astype(dtype)


def _sigmoid_lane_dense_kernel(p_ref, e_ref, c_ref, out_ref, *, precision):
    """p_ref: (TR, spr*4) packed params, e_ref: (spr*4, 4*_LANES) 0/1 matrix,
    c_ref/out_ref: (TR, _LANES) lane-dense concentrations / responses."""
    L = c_ref.shape[-1]
    # Per-element parameter broadcast on the (otherwise idle) MXU.
    pb = jnp.dot(p_ref[...], e_ref[...],
                 preferred_element_type=jnp.float32, precision=precision)
    b1 = pb[:, 0 * L:1 * L]
    b2 = pb[:, 1 * L:2 * L]
    b3 = pb[:, 2 * L:3 * L]
    b4 = pb[:, 3 * L:4 * L]
    c = c_ref[...].astype(jnp.float32)
    # sigmoid(z) = 0.5 * tanh(0.5 * z) + 0.5   (single EUP op)
    sig = 0.5 * jnp.tanh(0.5 * (b4 * (c - b3))) + 0.5
    out_ref[...] = (b1 + (b2 - b1) * sig).astype(out_ref.dtype)


def _sigmoid_rowparam_kernel(p_ref, c_ref, out_ref):
    """Fallback (lane-sparse) path: p_ref (TB, 4); c_ref/out_ref (TB, n_conc)."""
    p = p_ref[...]
    b1 = p[:, 0:1]
    b2 = p[:, 1:2]
    b3 = p[:, 2:3]
    b4 = p[:, 3:4]
    c = c_ref[...].astype(jnp.float32)
    sig = 0.5 * jnp.tanh(0.5 * (b4 * (c - b3))) + 0.5
    out_ref[...] = (b1 + (b2 - b1) * sig).astype(out_ref.dtype)


def sigmoid_model_forward(params, d, l, c, io_dtype=None):
    """4-parameter sigmoid dose-response forward pass.

    params: dict with B1l, B2l, B3l, B4l [n_lines], B4ld [n_lines, n_drugs]
    d, l  : int32 [batch] drug / cell-line indices
    c     : [batch, n_conc] concentrations
    io_dtype: dtype used to stream c/out through the kernel (jnp.bfloat16 on
      v6e/v7x halves HBM traffic); in-kernel math is always f32.
    """
    batch, n_conc = c.shape
    io_dtype = jnp.dtype(c.dtype if io_dtype is None else io_dtype)
    item = io_dtype.itemsize

    # Gather per-sample curve parameters (tiny, done by XLA outside the
    # kernel) and pack them into one array -> one parameter DMA stream.
    p = jnp.stack([params["B1l"][l], params["B2l"][l], params["B3l"][l],
                   params["B4l"][l] + params["B4ld"][l, d]],
                  axis=-1).astype(jnp.float32)              # (batch, 4)

    vmem_cap = _vmem_capacity_bytes()
    tile_budget = int(vmem_cap * 0.45)        # 3 arrays x 2 buffers + temps
    vmem_limit = int(vmem_cap * 0.75)
    compiler_params = pltpu.CompilerParams(
        dimension_semantics=("parallel",), vmem_limit_bytes=vmem_limit)

    c_io = c.astype(io_dtype)
    spr = _LANES // n_conc if (n_conc <= _LANES and _LANES % n_conc == 0) else 0
    use_dense = spr > 0 and batch % spr == 0

    if use_dense:
        # -------- lane-dense path: free reshape, 128 useful lanes ----------
        n_rows = batch // spr
        # f32 I/O -> full-precision param matmul; bf16 I/O -> 1-pass bf16 MXU.
        mm_dtype = jnp.float32 if item >= 4 else jnp.bfloat16
        precision = (jax.lax.Precision.HIGHEST if mm_dtype == jnp.float32
                     else jax.lax.Precision.DEFAULT)
        p2 = p.reshape(n_rows, spr * 4).astype(mm_dtype)
        c2 = c_io.reshape(n_rows, _LANES)
        e = _expansion_matrix(n_conc, spr, mm_dtype)        # (spr*4, 4*_LANES)

        per_row = (2 * (2 * _LANES * item + _LANES * 4)     # c+out+p, 2 buffers
                   + 12 * _LANES * 4)                       # f32 temps (pb, b1..b4)
        tr = _pick_row_tile(n_rows, per_row, tile_budget)
        grid = ((n_rows + tr - 1) // tr,)

        out2 = pl.pallas_call(
            functools.partial(_sigmoid_lane_dense_kernel, precision=precision),
            out_shape=jax.ShapeDtypeStruct((n_rows, _LANES), io_dtype),
            grid_spec=pltpu.PrefetchScalarGridSpec(
                num_scalar_prefetch=0,
                grid=grid,
                in_specs=[
                    pl.BlockSpec((tr, spr * 4), lambda i: (i, 0)),       # params
                    pl.BlockSpec((spr * 4, 4 * _LANES), lambda i: (0, 0)),  # E (resident)
                    pl.BlockSpec((tr, _LANES), lambda i: (i, 0)),        # concentrations
                ],
                out_specs=pl.BlockSpec((tr, _LANES), lambda i: (i, 0)),
            ),
            compiler_params=compiler_params,
        )(p2, e, c2)
        return out2.reshape(batch, n_conc)

    # -------- fallback path: n_conc does not pack evenly into 128 lanes -----
    lanes_pad = ((n_conc + _LANES - 1) // _LANES) * _LANES
    per_row = 2 * (2 * lanes_pad * item + _LANES * 4) + 8 * lanes_pad * 4
    tb = _pick_row_tile(batch, per_row, tile_budget)
    grid = ((batch + tb - 1) // tb,)

    return pl.pallas_call(
        _sigmoid_rowparam_kernel,
        out_shape=jax.ShapeDtypeStruct((batch, n_conc), io_dtype),
        grid_spec=pltpu.PrefetchScalarGridSpec(
            num_scalar_prefetch=0,
            grid=grid,
            in_specs=[
                pl.BlockSpec((tb, 4), lambda i: (i, 0)),        # packed B1..B4
                pl.BlockSpec((tb, n_conc), lambda i: (i, 0)),   # concentrations
            ],
            out_specs=pl.BlockSpec((tb, n_conc), lambda i: (i, 0)),
        ),
        compiler_params=compiler_params,
    )(p, c_io)


def init_params(key, n_drugs, n_lines):
    k1, k2, k3, k4, k5 = jax.random.split(key, 5)
    return {
        "B1l": jax.random.normal(k1, (n_lines,), jnp.float32),
        "B2l": jax.random.normal(k2, (n_lines,), jnp.float32),
        "B3l": jax.random.normal(k3, (n_lines,), jnp.float32),
        "B4l": jax.random.normal(k4, (n_lines,), jnp.float32),
        "B4ld": jax.random.normal(k5, (n_lines, n_drugs), jnp.float32),
    }


def reference_forward(params, d, l, c):
    b1 = params["B1l"][l][:, None]
    b2 = params["B2l"][l][:, None]
    b3 = params["B3l"][l][:, None]
    b4 = (params["B4l"][l] + params["B4ld"][l, d])[:, None]
    return b1 + (b2 - b1) * jax.nn.sigmoid(b4 * (c - b3))


if __name__ == "__main__":
    key = jax.random.PRNGKey(0)
    n_drugs, n_lines = 6, 5
    batch, n_conc = 64, 16

    kp, kd, kl, kc, kc2 = jax.random.split(key, 5)
    params = init_params(kp, n_drugs, n_lines)
    d = jax.random.randint(kd, (batch,), 0, n_drugs, dtype=jnp.int32)
    l = jax.random.randint(kl, (batch,), 0, n_lines, dtype=jnp.int32)
    c = jax.random.uniform(kc, (batch, n_conc), jnp.float32, -2.0, 2.0)

    # 1) f32 I/O, lane-dense path.  Tolerance 5e-4 (the 0/1 broadcast matmul
    #    on the MXU is exact to within the f32 matmul pass decomposition).
    out = jax.block_until_ready(sigmoid_model_forward(params, d, l, c))
    ref = reference_forward(params, d, l, c)
    assert out.shape == (batch, n_conc)
    assert jnp.allclose(out, ref, atol=5e-4, rtol=5e-4)

    # 2) bf16-streaming I/O (halves HBM traffic on v6e/v7x).  Compare against
    #    a reference that applies the same bf16 rounding to c and the packed
    #    params, so only the bf16 output rounding remains.
    out_bf16 = jax.block_until_ready(
        sigmoid_model_forward(params, d, l, c, io_dtype=jnp.bfloat16))
    p_pack = jnp.stack([params["B1l"][l], params["B2l"][l], params["B3l"][l],
                        params["B4l"][l] + params["B4ld"][l, d]], axis=-1)
    p_bf = p_pack.astype(jnp.bfloat16).astype(jnp.float32)
    c_bf = c.astype(jnp.bfloat16).astype(jnp.float32)
    ref_bf16 = (p_bf[:, 0:1] + (p_bf[:, 1:2] - p_bf[:, 0:1])
                * jax.nn.sigmoid(p_bf[:, 3:4] * (c_bf - p_bf[:, 2:3])))
    assert out_bf16.dtype == jnp.bfloat16
    assert jnp.allclose(out_bf16.astype(jnp.float32), ref_bf16,
                        atol=5e-2, rtol=5e-2)

    # 3) awkward n_conc (does not divide 128) -> lane-sparse fallback path.
    c_odd = jax.random.uniform(kc2, (16, 24), jnp.float32, -2.0, 2.0)
    out_odd = jax.block_until_ready(
        sigmoid_model_forward(params, d[:16], l[:16], c_odd))
    ref_odd = reference_forward(params, d[:16], l[:16], c_odd)
    assert jnp.allclose(out_odd, ref_odd, atol=1e-5, rtol=1e-5)

    print("KERNEL_OK")
</pallas_src>

<mosaic_0001>
module attributes {stable_mosaic.version = 11 : i64} {
  func.func @_sigmoid_lane_dense_kernel(%arg0: i32, %arg1: memref<8x32xf32, #tpu.memory_space<vmem>>, %arg2: memref<32x512xf32, #tpu.memory_space<vmem>>, %arg3: memref<8x128xf32, #tpu.memory_space<vmem>>, %arg4: memref<8x128xf32, #tpu.memory_space<vmem>>) attributes {dimension_semantics = [#tpu.dimension_semantics<parallel>], iteration_bounds = array<i64: 1>, scalar_prefetch = 0 : i64, scratch_operands = 0 : i64, tpu.core_type = #tpu.core_type<tc>, window_params = [{transform_indices = @transform_0, window_bounds = array<i64: 8, 32>}, {pipeline_mode = #tpu.pipeline_mode<synchronous>, transform_indices = @transform_1, window_bounds = array<i64: 32, 512>}, {transform_indices = @transform_2, window_bounds = array<i64: 8, 128>}, {transform_indices = @transform_3, window_bounds = array<i64: 8, 128>}]} {
    %c0 = arith.constant 0 : index
    %c0_0 = arith.constant 0 : index
    %0 = vector.load %arg1[%c0, %c0_0] : memref<8x32xf32, #tpu.memory_space<vmem>>, vector<8x32xf32>
    %c0_1 = arith.constant 0 : index
    %c0_2 = arith.constant 0 : index
    %1 = vector.load %arg2[%c0_1, %c0_2] : memref<32x512xf32, #tpu.memory_space<vmem>>, vector<32x512xf32>
    %cst = arith.constant dense<0.000000e+00> : vector<8x512xf32>
    %2 = tpu.matmul %0, %1, %cst {dimension_numbers = #tpu.dot_dimension_numbers<[1], [0], [0], [1], [0, 0, 1, 1], [], []>, precision = #tpu.contract_precision<fp32>} : vector<8x32xf32>, vector<32x512xf32>, vector<8x512xf32> -> vector<8x512xf32>
    %3 = vector.extract_strided_slice %2 {offsets = [0, 0], sizes = [8, 128], strides = [1, 1]} : vector<8x512xf32> to vector<8x128xf32>
    %4 = vector.extract_strided_slice %2 {offsets = [0, 128], sizes = [8, 128], strides = [1, 1]} : vector<8x512xf32> to vector<8x128xf32>
    %5 = vector.extract_strided_slice %2 {offsets = [0, 256], sizes = [8, 128], strides = [1, 1]} : vector<8x512xf32> to vector<8x128xf32>
    %6 = vector.extract_strided_slice %2 {offsets = [0, 384], sizes = [8, 128], strides = [1, 1]} : vector<8x512xf32> to vector<8x128xf32>
    %c0_3 = arith.constant 0 : index
    %c0_4 = arith.constant 0 : index
    %7 = vector.load %arg3[%c0_3, %c0_4] : memref<8x128xf32, #tpu.memory_space<vmem>>, vector<8x128xf32>
    %8 = arith.subf %7, %5 : vector<8x128xf32>
    %9 = arith.mulf %6, %8 : vector<8x128xf32>
    %cst_5 = arith.constant 5.000000e-01 : f32
    %10 = vector.broadcast %cst_5 : f32 to vector<8x128xf32>
    %11 = arith.mulf %10, %9 : vector<8x128xf32>
    %12 = math.tanh %11 : vector<8x128xf32>
    %cst_6 = arith.constant 5.000000e-01 : f32
    %13 = vector.broadcast %cst_6 : f32 to vector<8x128xf32>
    %14 = arith.mulf %13, %12 : vector<8x128xf32>
    %cst_7 = arith.constant 5.000000e-01 : f32
    %15 = vector.broadcast %cst_7 : f32 to vector<8x128xf32>
    %16 = arith.addf %14, %15 : vector<8x128xf32>
    %17 = arith.subf %4, %3 : vector<8x128xf32>
    %18 = arith.mulf %17, %16 : vector<8x128xf32>
    %19 = arith.addf %3, %18 : vector<8x128xf32>
    %c0_8 = arith.constant 0 : index
    %c0_9 = arith.constant 0 : index
    %20 = vector.load %arg4[%c0_8, %c0_9] : memref<8x128xf32, #tpu.memory_space<vmem>>, vector<8x128xf32>
    tpu.vector_store %arg4[%c0_8, %c0_9], %19 {strides = array<i32>} : memref<8x128xf32, #tpu.memory_space<vmem>>, vector<8x128xf32>,
    return
  }
  func.func @transform_0(%arg0: i32) -> (i32, i32) {
    %c0_i32 = arith.constant 0 : i32
    %c0_i32_0 = arith.constant 0 : i32
    return %arg0, %c0_i32 : i32, i32
  }
  func.func @transform_1(%arg0: i32) -> (i32, i32) {
    %c0_i32 = arith.constant 0 : i32
    %c0_i32_0 = arith.constant 0 : i32
    %c0_i32_1 = arith.constant 0 : i32
    return %c0_i32, %c0_i32_0 : i32, i32
  }
  func.func @transform_2(%arg0: i32) -> (i32, i32) {
    %c0_i32 = arith.constant 0 : i32
    %c0_i32_0 = arith.constant 0 : i32
    return %arg0, %c0_i32 : i32, i32
  }
  func.func @transform_3(%arg0: i32) -> (i32, i32) {
    %c0_i32 = arith.constant 0 : i32
    %c0_i32_0 = arith.constant 0 : i32
    return %arg0, %c0_i32 : i32, i32
  }
}

</mosaic_0001>

<llo_original>
// kernel: tpu_custom_call.1
$region0: #{tpu_custom_call.1}
  #allocation0 [shape = 'u32[]', space=smem, size = 0x4, offset = 0x4, fixed_abs, tag = 'smem constant byte address 0x4 - core index']
  #allocation1 [shape = 'u32[144,128]{1,0:T(1,128)}', space=vmem, size = 0x12000, scoped, tag = 'internal scratch']
  %s0 = inlined_call_operand.hbm [shape: f32[8,32], index: 0, kind: input, shape index: {}]
  %s1 = inlined_call_operand.hbm [shape: f32[32,512], index: 1, kind: input, shape index: {}]
  %s2 = inlined_call_operand.hbm [shape: f32[8,128], index: 2, kind: input, shape index: {}]
  %s3 = inlined_call_operand.hbm [shape: f32[8,128], index: 3, kind: output, shape index: {}]
  %s4 = sld [smem:[#allocation0]]
  $region34: #{tpu_custom_call.1} parent=0
    _
  %s6 = ssub.s32 1, %s4
  %s7 = scalar_select 0, %s6, %s4
  $region1: #{tpu_custom_call.1} parent=0
    #allocation2 [shape = 'u8[4096]{0}', space=vmem, size = 0x1000, scoped, tag = 'input window, operand 0, single buffered']
    #allocation3 [shape = 's32[1]{0}', space=sflag, size = 0x4, scoped, tag = 'scoped memory for tpu_custom_call.1']
    #allocation4 [shape = 's32[1]{0}', space=sflag, size = 0x4, scoped, tag = 'scoped memory for tpu_custom_call.1']
    #allocation5 [shape = 'u8[65536]{0}', space=vmem, size = 0x10000, scoped, tag = 'input window, operand 1, single buffered']
    #allocation6 [shape = 's32[1]{0}', space=sflag, size = 0x4, scoped, tag = 'scoped memory for tpu_custom_call.1']
    #allocation7 [shape = 'u8[4096]{0}', space=vmem, size = 0x1000, scoped, tag = 'input window, operand 2, single buffered']
    #allocation8 [shape = 'u8[4096]{0}', space=vmem, size = 0x1000, scoped, tag = 'output window, operand 0, single buffered']
    %8 = vsyncpa [#allocation3], 0
    %9 = vsyncpa [#allocation6], 0
    %10 = vsyncpa [#allocation4], 0
    // Predicated region
    $region2: #{tpu_custom_call.1} parent=1 // pred_check
      _
    $region3: #{tpu_custom_call.1} parent=1 // pred_check_branch
      %12 = sbr.rel (0) target = $region5
    $region4: #{tpu_custom_call.1} parent=1 // pred_region
      %s14 = ssub.s32 128, 128
      %15 = vsyncadd [#allocation3], %s14
      %s17 = sshll.u32 [#allocation2], 4
      %s18 = int_to_ptr.vmem [resolvable:$true] %s17
      %20 = dma.hbm_to_vmem [thread:$0]  %s0, 128, %s18, [#allocation3]
    $region5: #{tpu_custom_call.1} parent=1 // pred_fallthru
      _
    // Predicated region
    $region6: #{tpu_custom_call.1} parent=1 // pred_check
      _
    $region7: #{tpu_custom_call.1} parent=1 // pred_check_branch
      %22 = sbr.rel (0) target = $region9
    $region8: #{tpu_custom_call.1} parent=1 // pred_region
      %s24 = ssub.s32 2048, 2048
      %25 = vsyncadd [#allocation6], %s24
      %s26 = sshll.u32 [#allocation5], 4
      %s27 = int_to_ptr.vmem [resolvable:$true] %s26
      %32 = dma.hbm_to_vmem [thread:$0]  %s1, 2048, %s27, [#allocation6], 512, 512, 32
    $region9: #{tpu_custom_call.1} parent=1 // pred_fallthru
      _
    // Predicated region
    $region10: #{tpu_custom_call.1} parent=1 // pred_check
      _
    $region11: #{tpu_custom_call.1} parent=1 // pred_check_branch
      %34 = sbr.rel (0) target = $region13
    $region12: #{tpu_custom_call.1} parent=1 // pred_region
      %s36 = ssub.s32 128, 128
      %37 = vsyncadd [#allocation6], %s36
      %s39 = sshll.u32 [#allocation7], 4
      %s40 = int_to_ptr.vmem [resolvable:$true] %s39
      %42 = dma.hbm_to_vmem [thread:$0]  %s2, 128, %s40, [#allocation6]
    $region13: #{tpu_custom_call.1} parent=1 // pred_fallthru
      _
    // Predicated region
    $region14: #{tpu_custom_call.1} parent=1 // pred_check
      _
    $region15: #{tpu_custom_call.1} parent=1 // pred_check_branch
      %44 = sbr.rel (0) target = $region17
    $region16: #{tpu_custom_call.1} parent=1 // pred_region
      %45 = dma.done [#allocation3], 128
    $region17: #{tpu_custom_call.1} parent=1 // pred_fallthru
      _
    // Predicated region
    $region18: #{tpu_custom_call.1} parent=1 // pred_check
      _
    $region19: #{tpu_custom_call.1} parent=1 // pred_check_branch
      %47 = sbr.rel (0) target = $region21
    $region20: #{tpu_custom_call.1} parent=1 // pred_region
      %48 = dma.done [#allocation6], 2048
    $region21: #{tpu_custom_call.1} parent=1 // pred_fallthru
      _
    // Predicated region
    $region22: #{tpu_custom_call.1} parent=1 // pred_check
      _
    $region23: #{tpu_custom_call.1} parent=1 // pred_check_branch
      %50 = sbr.rel (0) target = $region25
    $region24: #{tpu_custom_call.1} parent=1 // pred_region
      %51 = dma.done [#allocation6], 128
    $region25: #{tpu_custom_call.1} parent=1 // pred_fallthru
      _
    %v52 = vld [vmem:[#allocation2] sm:$0xff]
    %v53 = vld [vmem:[#allocation5] sm:$0xff]
    %v54 = vld [vmem:[#allocation5 + $0x8] sm:$0xff]
    %v55 = vld [vmem:[#allocation5 + $0x10] sm:$0xff]
    %v56 = vld [vmem:[#allocation5 + $0x18] sm:$0xff]
    %v57 = vld [vmem:[#allocation5 + $0x20] sm:$0xff]
    %v58 = vld [vmem:[#allocation5 + $0x28] sm:$0xff]
    %v59 = vld [vmem:[#allocation5 + $0x30] sm:$0xff]
    %v60 = vld [vmem:[#allocation5 + $0x38] sm:$0xff]
    %v61 = vld [vmem:[#allocation5 + $0x40] sm:$0xff]
    %v62 = vld [vmem:[#allocation5 + $0x48] sm:$0xff]
    %v63 = vld [vmem:[#allocation5 + $0x50] sm:$0xff]
    %v64 = vld [vmem:[#allocation5 + $0x58] sm:$0xff]
    %v65 = vld [vmem:[#allocation5 + $0x60] sm:$0xff]
    %v66 = vld [vmem:[#allocation5 + $0x68] sm:$0xff]
    %v67 = vld [vmem:[#allocation5 + $0x70] sm:$0xff]
    %v68 = vld [vmem:[#allocation5 + $0x78] sm:$0xff]
    %vm69 = vcmask 261120
    %v71 = vsel %vm69, %v52, 0
    %v73 = vand.u32 %v54, 4294901760
    %74 = vmatprep.subr.mxu0 %v73
    %v75 = vand.u32 %v53, 4294901760
    %76 = vmatpush1.msra.mxu0 %v75
    %v77 = vand.u32 %v58, 4294901760
    %78 = vmatprep.subr.mxu0 %v77
    %v79 = vand.u32 %v57, 4294901760
    %80 = vmatpush1.msra.mxu0 %v79
    %v81 = vand.u32 %v62, 4294901760
    %82 = vmatprep.subr.mxu0 %v81
    %v83 = vand.u32 %v61, 4294901760
    %84 = vmatpush1.msra.mxu0 %v83
    %v85 = vand.u32 %v66, 4294901760
    %86 = vmatprep.subr.mxu0 %v85
    %v87 = vand.u32 %v65, 4294901760
    %88 = vmatpush1.msra.mxu0 %v87
    %89 = vmatprep.subr.mxu0 0.0
    %90 = vmatpush1.msra.mxu0 0.0
    %91 = vmatprep.subr.mxu0 0.0
    %92 = vmatpush1.msra.mxu0 0.0
    %93 = vmatprep.subr.mxu0 0.0
    %94 = vmatpush1.msra.mxu0 0.0
    %95 = vmatprep.subr.mxu0 0.0
    %96 = vmatpush1.msra.mxu0 0.0
    %97 = vmatprep.subr.mxu0 0.0
    %98 = vmatpush1.msra.mxu0 0.0
    %99 = vmatprep.subr.mxu0 0.0
    %100 = vmatpush1.msra.mxu0 0.0
    %101 = vmatprep.subr.mxu0 0.0
    %102 = vmatpush1.msra.mxu0 0.0
    %103 = vmatprep.subr.mxu0 0.0
    %104 = vmatpush1.msra.mxu0 0.0
    %105 = vmatprep.subr.mxu0 0.0
    %106 = vmatpush1.msra.mxu0 0.0
    %107 = vmatprep.subr.mxu0 0.0
    %108 = vmatpush1.msra.mxu0 0.0
    %109 = vmatprep.subr.mxu0 0.0
    %110 = vmatpush1.msra.mxu0 0.0
    %111 = vmatprep.subr.mxu0 0.0
    %112 = vmatpush1.msra.mxu0 0.0
    %113 = vmatprep.subr.mxu0 0.0
    %114 = vmatpush1.msra.mxu0 0.0
    %115 = vmatprep.subr.mxu0 0.0
    %116 = vmatpush1.msra.mxu0 0.0
    %117 = vmatprep.subr.mxu0 0.0
    %118 = vmatpush1.msra.mxu0 0.0
    %119 = vmatprep.subr.mxu0 0.0
    %120 = vmatpush1.msra.mxu0 0.0
    %121 = vmatprep.subr.mxu0 0.0
    %122 = vmatpush1.msra.mxu0 0.0
    %123 = vmatprep.subr.mxu0 0.0
    %124 = vmatpush1.msra.mxu0 0.0
    %125 = vmatprep.subr.mxu0 0.0
    %126 = vmatpush1.msra.mxu0 0.0
    %127 = vmatprep.subr.mxu0 0.0
    %128 = vmatpush1.msra.mxu0 0.0
    %129 = vmatprep.subr.mxu0 0.0
    %130 = vmatpush1.msra.mxu0 0.0
    %131 = vmatprep.subr.mxu0 0.0
    %132 = vmatpush1.msra.mxu0 0.0
    %133 = vmatprep.subr.mxu0 0.0
    %134 = vmatpush1.msra.mxu0 0.0
    %135 = vmatprep.subr.mxu0 0.0
    %136 = vmatpush1.msra.mxu0 0.0
    %137 = vmatprep.subr.mxu0 0.0
    %138 = vmatpush1.msra.mxu0 0.0
    %139 = vmatprep.subr.mxu0 0.0
    %140 = vmatpush1.msra.mxu0 0.0
    %141 = vmatprep.subr.mxu0 0.0
    %142 = vmatpush1.msra.mxu0 0.0
    %143 = vmatprep.subr.mxu0 0.0
    %144 = vmatpush1.msra.mxu0 0.0
    %145 = vmatprep.mubr.f32.mxu0 0.0
    %v146 = vand.u32 %v71, 4294901760
    %v147 = vsub.f32 %v71, %v146
    %v148 = vand.u32 %v147, 4294901760
    %v149 = vsub.f32 %v147, %v148
    %v150 = vand.u32 %v149, 4294901760
    %151 = vmatmul.mubr.f32.gmra.mrb[0].mxu0 %v150
    %v152 = vpop.f32.mrb[0].mxu0
    %v153 = vadd.f32 0.0, %v152
    %v154 = vpop.f32.mrb[0].mxu0
    %v155 = vadd.f32 0.0, %v154
    %156 = vdwg.mxu0
    %v157 = vand.u32 %v54, 4294901760
    %v158 = vsub.f32 %v54, %v157
    %v159 = vand.u32 %v158, 4294901760
    %v160 = vsub.f32 %v158, %v159
    %v161 = vand.u32 %v160, 4294901760
    %162 = vmatprep.subr.mxu0 %v161
    %v163 = vand.u32 %v53, 4294901760
    %v164 = vsub.f32 %v53, %v163
    %v165 = vand.u32 %v164, 4294901760
    %v166 = vsub.f32 %v164, %v165
    %v167 = vand.u32 %v166, 4294901760
    %168 = vmatpush1.msra.mxu0 %v167
    %v169 = vand.u32 %v58, 4294901760
    %v170 = vsub.f32 %v58, %v169
    %v171 = vand.u32 %v170, 4294901760
    %v172 = vsub.f32 %v170, %v171
    %v173 = vand.u32 %v172, 4294901760
    %174 = vmatprep.subr.mxu0 %v173
    %v175 = vand.u32 %v57, 4294901760
    %v176 = vsub.f32 %v57, %v175
    %v177 = vand.u32 %v176, 4294901760
    %v178 = vsub.f32 %v176, %v177
    %v179 = vand.u32 %v178, 4294901760
    %180 = vmatpush1.msra.mxu0 %v179
    %v181 = vand.u32 %v62, 4294901760
    %v182 = vsub.f32 %v62, %v181
    %v183 = vand.u32 %v182, 4294901760
    %v184 = vsub.f32 %v182, %v183
    %v185 = vand.u32 %v184, 4294901760
    %186 = vmatprep.subr.mxu0 %v185
    %v187 = vand.u32 %v61, 4294901760
    %v188 = vsub.f32 %v61, %v187
    %v189 = vand.u32 %v188, 4294901760
    %v190 = vsub.f32 %v188, %v189
    %v191 = vand.u32 %v190, 4294901760
    %192 = vmatpush1.msra.mxu0 %v191
    %v193 = vand.u32 %v66, 4294901760
    %v194 = vsub.f32 %v66, %v193
    %v195 = vand.u32 %v194, 4294901760
    %v196 = vsub.f32 %v194, %v195
    %v197 = vand.u32 %v196, 4294901760
    %198 = vmatprep.subr.mxu0 %v197
    %v199 = vand.u32 %v65, 4294901760
    %v200 = vsub.f32 %v65, %v199
    %v201 = vand.u32 %v200, 4294901760
    %v202 = vsub.f32 %v200, %v201
    %v203 = vand.u32 %v202, 4294901760
    %204 = vmatpush1.msra.mxu0 %v203
    %205 = vmatprep.subr.mxu0 0.0
    %206 = vmatpush1.msra.mxu0 0.0
    %207 = vmatprep.subr.mxu0 0.0
    %208 = vmatpush1.msra.mxu0 0.0
    %209 = vmatprep.subr.mxu0 0.0
    %210 = vmatpush1.msra.mxu0 0.0
    %211 = vmatprep.subr.mxu0 0.0
    %212 = vmatpush1.msra.mxu0 0.0
    %213 = vmatprep.subr.mxu0 0.0
    %214 = vmatpush1.msra.mxu0 0.0
    %215 = vmatprep.subr.mxu0 0.0
    %216 = vmatpush1.msra.mxu0 0.0
    %217 = vmatprep.subr.mxu0 0.0
    %218 = vmatpush1.msra.mxu0 0.0
    %219 = vmatprep.subr.mxu0 0.0
    %220 = vmatpush1.msra.mxu0 0.0
    %221 = vmatprep.subr.mxu0 0.0
    %222 = vmatpush1.msra.mxu0 0.0
    %223 = vmatprep.subr.mxu0 0.0
    %224 = vmatpush1.msra.mxu0 0.0
    %225 = vmatprep.subr.mxu0 0.0
    %226 = vmatpush1.msra.mxu0 0.0
    %227 = vmatprep.subr.mxu0 0.0
    %228 = vmatpush1.msra.mxu0 0.0
    %229 = vmatprep.subr.mxu0 0.0
    %230 = vmatpush1.msra.mxu0 0.0
    %231 = vmatprep.subr.mxu0 0.0
    %232 = vmatpush1.msra.mxu0 0.0
    %233 = vmatprep.subr.mxu0 0.0
    %234 = vmatpush1.msra.mxu0 0.0
    %235 = vmatprep.subr.mxu0 0.0
    %236 = vmatpush1.msra.mxu0 0.0
    %237 = vmatprep.subr.mxu0 0.0
    %238 = vmatpush1.msra.mxu0 0.0
    %239 = vmatprep.subr.mxu0 0.0
    %240 = vmatpush1.msra.mxu0 0.0
    %241 = vmatprep.subr.mxu0 0.0
    %242 = vmatpush1.msra.mxu0 0.0
    %243 = vmatprep.subr.mxu0 0.0
    %244 = vmatpush1.msra.mxu0 0.0
    %245 = vmatprep.subr.mxu0 0.0
    %246 = vmatpush1.msra.mxu0 0.0
    %247 = vmatprep.subr.mxu0 0.0
    %248 = vmatpush1.msra.mxu0 0.0
    %249 = vmatprep.subr.mxu0 0.0
    %250 = vmatpush1.msra.mxu0 0.0
    %251 = vmatprep.subr.mxu0 0.0
    %252 = vmatpush1.msra.mxu0 0.0
    %253 = vmatprep.subr.mxu0 0.0
    %254 = vmatpush1.msra.mxu0 0.0
    %255 = vmatprep.subr.mxu0 0.0
    %256 = vmatpush1.msra.mxu0 0.0
    %257 = vmatprep.subr.mxu0 0.0
    %258 = vmatpush1.msra.mxu0 0.0
    %259 = vmatprep.subr.mxu0 0.0
    %260 = vmatpush1.msra.mxu0 0.0
    %261 = vmatprep.mubr.f32.mxu0 0.0
    %v262 = vand.u32 %v71, 4294901760
    %263 = vmatmul.mubr.f32.gmra.mrb[0].mxu0 %v262
    %v264 = vpop.f32.mrb[0].mxu0
    %v265 = vadd.f32 %v153, %v264
    %v266 = vpop.f32.mrb[0].mxu0
    %v267 = vadd.f32 %v155, %v266
    %268 = vdwg.mxu0
    %v269 = vand.u32 %v54, 4294901760
    %v270 = vsub.f32 %v54, %v269
    %271 = vmatprep.subr.mxu0 %v270
    %v272 = vand.u32 %v53, 4294901760
    %v273 = vsub.f32 %v53, %v272
    %274 = vmatpush1.msra.mxu0 %v273
    %v275 = vand.u32 %v58, 4294901760
    %v276 = vsub.f32 %v58, %v275
    %277 = vmatprep.subr.mxu0 %v276
    %v278 = vand.u32 %v57, 4294901760
    %v279 = vsub.f32 %v57, %v278
    %280 = vmatpush1.msra.mxu0 %v279
    %v281 = vand.u32 %v62, 4294901760
    %v282 = vsub.f32 %v62, %v281
    %283 = vmatprep.subr.mxu0 %v282
    %v284 = vand.u32 %v61, 4294901760
    %v285 = vsub.f32 %v61, %v284
    %286 = vmatpush1.msra.mxu0 %v285
    %v287 = vand.u32 %v66, 4294901760
    %v288 = vsub.f32 %v66, %v287
    %289 = vmatprep.subr.mxu0 %v288
    %v290 = vand.u32 %v65, 4294901760
    %v291 = vsub.f32 %v65, %v290
    %292 = vmatpush1.msra.mxu0 %v291
    %293 = vmatprep.subr.mxu0 0.0
    %294 = vmatpush1.msra.mxu0 0.0
    %295 = vmatprep.subr.mxu0 0.0
    %296 = vmatpush1.msra.mxu0 0.0
    %297 = vmatprep.subr.mxu0 0.0
    %298 = vmatpush1.msra.mxu0 0.0
    %299 = vmatprep.subr.mxu0 0.0
    %300 = vmatpush1.msra.mxu0 0.0
    %301 = vmatprep.subr.mxu0 0.0
    %302 = vmatpush1.msra.mxu0 0.0
    %303 = vmatprep.subr.mxu0 0.0
    %304 = vmatpush1.msra.mxu0 0.0
    %305 = vmatprep.subr.mxu0 0.0
    %306 = vmatpush1.msra.mxu0 0.0
    %307 = vmatprep.subr.mxu0 0.0
    %308 = vmatpush1.msra.mxu0 0.0
    %309 = vmatprep.subr.mxu0 0.0
    %310 = vmatpush1.msra.mxu0 0.0
    %311 = vmatprep.subr.mxu0 0.0
    %312 = vmatpush1.msra.mxu0 0.0
    %313 = vmatprep.subr.mxu0 0.0
    %314 = vmatpush1.msra.mxu0 0.0
    %315 = vmatprep.subr.mxu0 0.0
    %316 = vmatpush1.msra.mxu0 0.0
    %317 = vmatprep.subr.mxu0 0.0
    %318 = vmatpush1.msra.mxu0 0.0
    %319 = vmatprep.subr.mxu0 0.0
    %320 = vmatpush1.msra.mxu0 0.0
    %321 = vmatprep.subr.mxu0 0.0
    %322 = vmatpush1.msra.mxu0 0.0
    %323 = vmatprep.subr.mxu0 0.0
    %324 = vmatpush1.msra.mxu0 0.0
    %325 = vmatprep.subr.mxu0 0.0
    %326 = vmatpush1.msra.mxu0 0.0
    %327 = vmatprep.subr.mxu0 0.0
    %328 = vmatpush1.msra.mxu0 0.0
    %329 = vmatprep.subr.mxu0 0.0
    %330 = vmatpush1.msra.mxu0 0.0
    %331 = vmatprep.subr.mxu0 0.0
    %332 = vmatpush1.msra.mxu0 0.0
    %333 = vmatprep.subr.mxu0 0.0
    %334 = vmatpush1.msra.mxu0 0.0
    %335 = vmatprep.subr.mxu0 0.0
    %336 = vmatpush1.msra.mxu0 0.0
    %337 = vmatprep.subr.mxu0 0.0
    %338 = vmatpush1.msra.mxu0 0.0
    %339 = vmatprep.subr.mxu0 0.0
    %340 = vmatpush1.msra.mxu0 0.0
    %341 = vmatprep.subr.mxu0 0.0
    %342 = vmatpush1.msra.mxu0 0.0
    %343 = vmatprep.subr.mxu0 0.0
    %344 = vmatpush1.msra.mxu0 0.0
    %345 = vmatprep.subr.mxu0 0.0
    %346 = vmatpush1.msra.mxu0 0.0
    %347 = vmatprep.subr.mxu0 0.0
    %348 = vmatpush1.msra.mxu0 0.0
    %349 = vmatprep.mubr.f32.mxu0 0.0
    %v350 = vand.u32 %v71, 4294901760
    %v351 = vsub.f32 %v71, %v350
    %352 = vmatmul.mubr.f32.gmra.mrb[0].mxu0 %v351
    %v353 = vpop.f32.mrb[0].mxu0
    %v354 = vadd.f32 %v265, %v353
    %v355 = vpop.f32.mrb[0].mxu0
    %v356 = vadd.f32 %v267, %v355
    %357 = vdwg.mxu0
    %v358 = vand.u32 %v54, 4294901760
    %359 = vmatprep.subr.mxu0 %v358
    %v360 = vand.u32 %v53, 4294901760
    %361 = vmatpush1.msra.mxu0 %v360
    %v362 = vand.u32 %v58, 4294901760
    %363 = vmatprep.subr.mxu0 %v362
    %v364 = vand.u32 %v57, 4294901760
    %365 = vmatpush1.msra.mxu0 %v364
    %v366 = vand.u32 %v62, 4294901760
    %367 = vmatprep.subr.mxu0 %v366
    %v368 = vand.u32 %v61, 4294901760
    %369 = vmatpush1.msra.mxu0 %v368
    %v370 = vand.u32 %v66, 4294901760
    %371 = vmatprep.subr.mxu0 %v370
    %v372 = vand.u32 %v65, 4294901760
    %373 = vmatpush1.msra.mxu0 %v372
    %374 = vmatprep.subr.mxu0 0.0
    %375 = vmatpush1.msra.mxu0 0.0
    %376 = vmatprep.subr.mxu0 0.0
    %377 = vmatpush1.msra.mxu0 0.0
    %378 = vmatprep.subr.mxu0 0.0
    %379 = vmatpush1.msra.mxu0 0.0
    %380 = vmatprep.subr.mxu0 0.0
    %381 = vmatpush1.msra.mxu0 0.0
    %382 = vmatprep.subr.mxu0 0.0
    %383 = vmatpush1.msra.mxu0 0.0
    %384 = vmatprep.subr.mxu0 0.0
    %385 = vmatpush1.msra.mxu0 0.0
    %386 = vmatprep.subr.mxu0 0.0
    %387 = vmatpush1.msra.mxu0 0.0
    %388 = vmatprep.subr.mxu0 0.0
    %389 = vmatpush1.msra.mxu0 0.0
    %390 = vmatprep.subr.mxu0 0.0
    %391 = vmatpush1.msra.mxu0 0.0
    %392 = vmatprep.subr.mxu0 0.0
    %393 = vmatpush1.msra.mxu0 0.0
    %394 = vmatprep.subr.mxu0 0.0
    %395 = vmatpush1.msra.mxu0 0.0
    %396 = vmatprep.subr.mxu0 0.0
    %397 = vmatpush1.msra.mxu0 0.0
    %398 = vmatprep.subr.mxu0 0.0
    %399 = vmatpush1.msra.mxu0 0.0
    %400 = vmatprep.subr.mxu0 0.0
    %401 = vmatpush1.msra.mxu0 0.0
    %402 = vmatprep.subr.mxu0 0.0
    %403 = vmatpush1.msra.mxu0 0.0
    %404 = vmatprep.subr.mxu0 0.0
    %405 = vmatpush1.msra.mxu0 0.0
    %406 = vmatprep.subr.mxu0 0.0
    %407 = vmatpush1.msra.mxu0 0.0
    %408 = vmatprep.subr.mxu0 0.0
    %409 = vmatpush1.msra.mxu0 0.0
    %410 = vmatprep.subr.mxu0 0.0
    %411 = vmatpush1.msra.mxu0 0.0
    %412 = vmatprep.subr.mxu0 0.0
    %413 = vmatpush1.msra.mxu0 0.0
    %414 = vmatprep.subr.mxu0 0.0
    %415 = vmatpush1.msra.mxu0 0.0
    %416 = vmatprep.subr.mxu0 0.0
    %417 = vmatpush1.msra.mxu0 0.0
    %418 = vmatprep.subr.mxu0 0.0
    %419 = vmatpush1.msra.mxu0 0.0
    %420 = vmatprep.subr.mxu0 0.0
    %421 = vmatpush1.msra.mxu0 0.0
    %422 = vmatprep.subr.mxu0 0.0
    %423 = vmatpush1.msra.mxu0 0.0
    %424 = vmatprep.subr.mxu0 0.0
    %425 = vmatpush1.msra.mxu0 0.0
    %426 = vmatprep.subr.mxu0 0.0
    %427 = vmatpush1.msra.mxu0 0.0
    %428 = vmatprep.subr.mxu0 0.0
    %429 = vmatpush1.msra.mxu0 0.0
    %430 = vmatprep.mubr.f32.mxu0 0.0
    %v431 = vand.u32 %v71, 4294901760
    %v432 = vsub.f32 %v71, %v431
    %v433 = vand.u32 %v432, 4294901760
    %434 = vmatmul.mubr.f32.gmra.mrb[0].mxu0 %v433
    %v435 = vpop.f32.mrb[0].mxu0
    %v436 = vadd.f32 %v354, %v435
    %v437 = vpop.f32.mrb[0].mxu0
    %v438 = vadd.f32 %v356, %v437
    %439 = vdwg.mxu0
    %v440 = vand.u32 %v54, 4294901760
    %v441 = vsub.f32 %v54, %v440
    %v442 = vand.u32 %v441, 4294901760
    %443 = vmatprep.subr.mxu0 %v442
    %v444 = vand.u32 %v53, 4294901760
    %v445 = vsub.f32 %v53, %v444
    %v446 = vand.u32 %v445, 4294901760
    %447 = vmatpush1.msra.mxu0 %v446
    %v448 = vand.u32 %v58, 4294901760
    %v449 = vsub.f32 %v58, %v448
    %v450 = vand.u32 %v449, 4294901760
    %451 = vmatprep.subr.mxu0 %v450
    %v452 = vand.u32 %v57, 4294901760
    %v453 = vsub.f32 %v57, %v452
    %v454 = vand.u32 %v453, 4294901760
    %455 = vmatpush1.msra.mxu0 %v454
    %v456 = vand.u32 %v62, 4294901760
    %v457 = vsub.f32 %v62, %v456
    %v458 = vand.u32 %v457, 4294901760
    %459 = vmatprep.subr.mxu0 %v458
    %v460 = vand.u32 %v61, 4294901760
    %v461 = vsub.f32 %v61, %v460
    %v462 = vand.u32 %v461, 4294901760
    %463 = vmatpush1.msra.mxu0 %v462
    %v464 = vand.u32 %v66, 4294901760
    %v465 = vsub.f32 %v66, %v464
    %v466 = vand.u32 %v465, 4294901760
    %467 = vmatprep.subr.mxu0 %v466
    %v468 = vand.u32 %v65, 4294901760
    %v469 = vsub.f32 %v65, %v468
    %v470 = vand.u32 %v469, 4294901760
    %471 = vmatpush1.msra.mxu0 %v470
    %472 = vmatprep.subr.mxu0 0.0
    %473 = vmatpush1.msra.mxu0 0.0
    %474 = vmatprep.subr.mxu0 0.0
    %475 = vmatpush1.msra.mxu0 0.0
    %476 = vmatprep.subr.mxu0 0.0
    %477 = vmatpush1.msra.mxu0 0.0
    %478 = vmatprep.subr.mxu0 0.0
    %479 = vmatpush1.msra.mxu0 0.0
    %480 = vmatprep.subr.mxu0 0.0
    %481 = vmatpush1.msra.mxu0 0.0
    %482 = vmatprep.subr.mxu0 0.0
    %483 = vmatpush1.msra.mxu0 0.0
    %484 = vmatprep.subr.mxu0 0.0
    %485 = vmatpush1.msra.mxu0 0.0
    %486 = vmatprep.subr.mxu0 0.0
    %487 = vmatpush1.msra.mxu0 0.0
    %488 = vmatprep.subr.mxu0 0.0
    %489 = vmatpush1.msra.mxu0 0.0
    %490 = vmatprep.subr.mxu0 0.0
    %491 = vmatpush1.msra.mxu0 0.0
    %492 = vmatprep.subr.mxu0 0.0
    %493 = vmatpush1.msra.mxu0 0.0
    %494 = vmatprep.subr.mxu0 0.0
    %495 = vmatpush1.msra.mxu0 0.0
    %496 = vmatprep.subr.mxu0 0.0
    %497 = vmatpush1.msra.mxu0 0.0
    %498 = vmatprep.subr.mxu0 0.0
    %499 = vmatpush1.msra.mxu0 0.0
    %500 = vmatprep.subr.mxu0 0.0
    %501 = vmatpush1.msra.mxu0 0.0
    %502 = vmatprep.subr.mxu0 0.0
    %503 = vmatpush1.msra.mxu0 0.0
    %504 = vmatprep.subr.mxu0 0.0
    %505 = vmatpush1.msra.mxu0 0.0
    %506 = vmatprep.subr.mxu0 0.0
    %507 = vmatpush1.msra.mxu0 0.0
    %508 = vmatprep.subr.mxu0 0.0
    %509 = vmatpush1.msra.mxu0 0.0
    %510 = vmatprep.subr.mxu0 0.0
    %511 = vmatpush1.msra.mxu0 0.0
    %512 = vmatprep.subr.mxu0 0.0
    %513 = vmatpush1.msra.mxu0 0.0
    %514 = vmatprep.subr.mxu0 0.0
    %515 = vmatpush1.msra.mxu0 0.0
    %516 = vmatprep.subr.mxu0 0.0
    %517 = vmatpush1.msra.mxu0 0.0
    %518 = vmatprep.subr.mxu0 0.0
    %519 = vmatpush1.msra.mxu0 0.0
    %520 = vmatprep.subr.mxu0 0.0
    %521 = vmatpush1.msra.mxu0 0.0
    %522 = vmatprep.subr.mxu0 0.0
    %523 = vmatpush1.msra.mxu0 0.0
    %524 = vmatprep.subr.mxu0 0.0
    %525 = vmatpush1.msra.mxu0 0.0
    %526 = vmatprep.subr.mxu0 0.0
    %527 = vmatpush1.msra.mxu0 0.0
    %528 = vmatprep.mubr.f32.mxu0 0.0
    %v529 = vand.u32 %v71, 4294901760
    %530 = vmatmul.mubr.f32.gmra.mrb[0].mxu0 %v529
    %v531 = vpop.f32.mrb[0].mxu0
    %v532 = vadd.f32 %v436, %v531
    %v533 = vpop.f32.mrb[0].mxu0
    %v534 = vadd.f32 %v438, %v533
    %535 = vdwg.mxu0
    %v536 = vand.u32 %v54, 4294901760
    %537 = vmatprep.subr.mxu0 %v536
    %v538 = vand.u32 %v53, 4294901760
    %539 = vmatpush1.msra.mxu0 %v538
    %v540 = vand.u32 %v58, 4294901760
    %541 = vmatprep.subr.mxu0 %v540
    %v542 = vand.u32 %v57, 4294901760
    %543 = vmatpush1.msra.mxu0 %v542
    %v544 = vand.u32 %v62, 4294901760
    %545 = vmatprep.subr.mxu0 %v544
    %v546 = vand.u32 %v61, 4294901760
    %547 = vmatpush1.msra.mxu0 %v546
    %v548 = vand.u32 %v66, 4294901760
    %549 = vmatprep.subr.mxu0 %v548
    %v550 = vand.u32 %v65, 4294901760
    %551 = vmatpush1.msra.mxu0 %v550
    %552 = vmatprep.subr.mxu0 0.0
    %553 = vmatpush1.msra.mxu0 0.0
    %554 = vmatprep.subr.mxu0 0.0
    %555 = vmatpush1.msra.mxu0 0.0
    %556 = vmatprep.subr.mxu0 0.0
    %557 = vmatpush1.msra.mxu0 0.0
    %558 = vmatprep.subr.mxu0 0.0
    %559 = vmatpush1.msra.mxu0 0.0
    %560 = vmatprep.subr.mxu0 0.0
    %561 = vmatpush1.msra.mxu0 0.0
    %562 = vmatprep.subr.mxu0 0.0
    %563 = vmatpush1.msra.mxu0 0.0
    %564 = vmatprep.subr.mxu0 0.0
    %565 = vmatpush1.msra.mxu0 0.0
    %566 = vmatprep.subr.mxu0 0.0
    %567 = vmatpush1.msra.mxu0 0.0
    %568 = vmatprep.subr.mxu0 0.0
    %569 = vmatpush1.msra.mxu0 0.0
    %570 = vmatprep.subr.mxu0 0.0
    %571 = vmatpush1.msra.mxu0 0.0
    %572 = vmatprep.subr.mxu0 0.0
    %573 = vmatpush1.msra.mxu0 0.0
    %574 = vmatprep.subr.mxu0 0.0
    %575 = vmatpush1.msra.mxu0 0.0
    %576 = vmatprep.subr.mxu0 0.0
    %577 = vmatpush1.msra.mxu0 0.0
    %578 = vmatprep.subr.mxu0 0.0
    %579 = vmatpush1.msra.mxu0 0.0
    %580 = vmatprep.subr.mxu0 0.0
    %581 = vmatpush1.msra.mxu0 0.0
    %582 = vmatprep.subr.mxu0 0.0
    %583 = vmatpush1.msra.mxu0 0.0
    %584 = vmatprep.subr.mxu0 0.0
    %585 = vmatpush1.msra.mxu0 0.0
    %586 = vmatprep.subr.mxu0 0.0
    %587 = vmatpush1.msra.mxu0 0.0
    %588 = vmatprep.subr.mxu0 0.0
    %589 = vmatpush1.msra.mxu0 0.0
    %590 = vmatprep.subr.mxu0 0.0
    %591 = vmatpush1.msra.mxu0 0.0
    %592 = vmatprep.subr.mxu0 0.0
    %593 = vmatpush1.msra.mxu0 0.0
    %594 = vmatprep.subr.mxu0 0.0
    %595 = vmatpush1.msra.mxu0 0.0
    %596 = vmatprep.subr.mxu0 0.0
    %597 = vmatpush1.msra.mxu0 0.0
    %598 = vmatprep.subr.mxu0 0.0
    %599 = vmatpush1.msra.mxu0 0.0
    %600 = vmatprep.subr.mxu0 0.0
    %601 = vmatpush1.msra.mxu0 0.0
    %602 = vmatprep.subr.mxu0 0.0
    %603 = vmatpush1.msra.mxu0 0.0
    %604 = vmatprep.subr.mxu0 0.0
    %605 = vmatpush1.msra.mxu0 0.0
    %606 = vmatprep.subr.mxu0 0.0
    %607 = vmatpush1.msra.mxu0 0.0
    %608 = vmatprep.mubr.f32.mxu0 0.0
    %v609 = vand.u32 %v71, 4294901760
    %610 = vmatmul.mubr.f32.gmra.mrb[0].mxu0 %v609
    %v611 = vpop.f32.mrb[0].mxu0
    %v612 = vadd.f32 %v532, %v611
    %v613 = vpop.f32.mrb[0].mxu0
    %v614 = vadd.f32 %v534, %v613
    %615 = vdwg.mxu0
    %v616 = vand.u32 %v56, 4294901760
    %617 = vmatprep.subr.mxu0 %v616
    %v618 = vand.u32 %v55, 4294901760
    %619 = vmatpush1.msra.mxu0 %v618
    %v620 = vand.u32 %v60, 4294901760
    %621 = vmatprep.subr.mxu0 %v620
    %v622 = vand.u32 %v59, 4294901760
    %623 = vmatpush1.msra.mxu0 %v622
    %v624 = vand.u32 %v64, 4294901760
    %625 = vmatprep.subr.mxu0 %v624
    %v626 = vand.u32 %v63, 4294901760
    %627 = vmatpush1.msra.mxu0 %v626
    %v628 = vand.u32 %v68, 4294901760
    %629 = vmatprep.subr.mxu0 %v628
    %v630 = vand.u32 %v67, 4294901760
    %631 = vmatpush1.msra.mxu0 %v630
    %632 = vmatprep.subr.mxu0 0.0
    %633 = vmatpush1.msra.mxu0 0.0
    %634 = vmatprep.subr.mxu0 0.0
    %635 = vmatpush1.msra.mxu0 0.0
    %636 = vmatprep.subr.mxu0 0.0
    %637 = vmatpush1.msra.mxu0 0.0
    %638 = vmatprep.subr.mxu0 0.0
    %639 = vmatpush1.msra.mxu0 0.0
    %640 = vmatprep.subr.mxu0 0.0
    %641 = vmatpush1.msra.mxu0 0.0
    %642 = vmatprep.subr.mxu0 0.0
    %643 = vmatpush1.msra.mxu0 0.0
    %644 = vmatprep.subr.mxu0 0.0
    %645 = vmatpush1.msra.mxu0 0.0
    %646 = vmatprep.subr.mxu0 0.0
    %647 = vmatpush1.msra.mxu0 0.0
    %648 = vmatprep.subr.mxu0 0.0
    %649 = vmatpush1.msra.mxu0 0.0
    %650 = vmatprep.subr.mxu0 0.0
    %651 = vmatpush1.msra.mxu0 0.0
    %652 = vmatprep.subr.mxu0 0.0
    %653 = vmatpush1.msra.mxu0 0.0
    %654 = vmatprep.subr.mxu0 0.0
    %655 = vmatpush1.msra.mxu0 0.0
    %656 = vmatprep.subr.mxu0 0.0
    %657 = vmatpush1.msra.mxu0 0.0
    %658 = vmatprep.subr.mxu0 0.0
    %659 = vmatpush1.msra.mxu0 0.0
    %660 = vmatprep.subr.mxu0 0.0
    %661 = vmatpush1.msra.mxu0 0.0
    %662 = vmatprep.subr.mxu0 0.0
    %663 = vmatpush1.msra.mxu0 0.0
    %664 = vmatprep.subr.mxu0 0.0
    %665 = vmatpush1.msra.mxu0 0.0
    %666 = vmatprep.subr.mxu0 0.0
    %667 = vmatpush1.msra.mxu0 0.0
    %668 = vmatprep.subr.mxu0 0.0
    %669 = vmatpush1.msra.mxu0 0.0
    %670 = vmatprep.subr.mxu0 0.0
    %671 = vmatpush1.msra.mxu0 0.0
    %672 = vmatprep.subr.mxu0 0.0
    %673 = vmatpush1.msra.mxu0 0.0
    %674 = vmatprep.subr.mxu0 0.0
    %675 = vmatpush1.msra.mxu0 0.0
    %676 = vmatprep.subr.mxu0 0.0
    %677 = vmatpush1.msra.mxu0 0.0
    %678 = vmatprep.subr.mxu0 0.0
    %679 = vmatpush1.msra.mxu0 0.0
    %680 = vmatprep.subr.mxu0 0.0
    %681 = vmatpush1.msra.mxu0 0.0
    %682 = vmatprep.subr.mxu0 0.0
    %683 = vmatpush1.msra.mxu0 0.0
    %684 = vmatprep.subr.mxu0 0.0
    %685 = vmatpush1.msra.mxu0 0.0
    %686 = vmatprep.subr.mxu0 0.0
    %687 = vmatpush1.msra.mxu0 0.0
    %688 = vmatprep.mubr.f32.mxu0 0.0
    %v689 = vand.u32 %v71, 4294901760
    %v690 = vsub.f32 %v71, %v689
    %v691 = vand.u32 %v690, 4294901760
    %v692 = vsub.f32 %v690, %v691
    %v693 = vand.u32 %v692, 4294901760
    %694 = vmatmul.mubr.f32.gmra.mrb[0].mxu0 %v693
    %v695 = vpop.f32.mrb[0].mxu0
    %v696 = vadd.f32 0.0, %v695
    %v697 = vpop.f32.mrb[0].mxu0
    %v698 = vadd.f32 0.0, %v697
    %699 = vdwg.mxu0
    %v700 = vand.u32 %v56, 4294901760
    %v701 = vsub.f32 %v56, %v700
    %v702 = vand.u32 %v701, 4294901760
    %v703 = vsub.f32 %v701, %v702
    %v704 = vand.u32 %v703, 4294901760
    %705 = vmatprep.subr.mxu0 %v704
    %v706 = vand.u32 %v55, 4294901760
    %v707 = vsub.f32 %v55, %v706
    %v708 = vand.u32 %v707, 4294901760
    %v709 = vsub.f32 %v707, %v708
    %v710 = vand.u32 %v709, 4294901760
    %711 = vmatpush1.msra.mxu0 %v710
    %v712 = vand.u32 %v60, 4294901760
    %v713 = vsub.f32 %v60, %v712
    %v714 = vand.u32 %v713, 4294901760
    %v715 = vsub.f32 %v713, %v714
    %v716 = vand.u32 %v715, 4294901760
    %717 = vmatprep.subr.mxu0 %v716
    %v718 = vand.u32 %v59, 4294901760
    %v719 = vsub.f32 %v59, %v718
    %v720 = vand.u32 %v719, 4294901760
    %v721 = vsub.f32 %v719, %v720
    %v722 = vand.u32 %v721, 4294901760
    %723 = vmatpush1.msra.mxu0 %v722
    %v724 = vand.u32 %v64, 4294901760
    %v725 = vsub.f32 %v64, %v724
    %v726 = vand.u32 %v725, 4294901760
    %v727 = vsub.f32 %v725, %v726
    %v728 = vand.u32 %v727, 4294901760
    %729 = vmatprep.subr.mxu0 %v728
    %v730 = vand.u32 %v63, 4294901760
    %v731 = vsub.f32 %v63, %v730
    %v732 = vand.u32 %v731, 4294901760
    %v733 = vsub.f32 %v731, %v732
    %v734 = vand.u32 %v733, 4294901760
    %735 = vmatpush1.msra.mxu0 %v734
    %v736 = vand.u32 %v68, 4294901760
    %v737 = vsub.f32 %v68, %v736
    %v738 = vand.u32 %v737, 4294901760
    %v739 = vsub.f32 %v737, %v738
    %v740 = vand.u32 %v739, 4294901760
    %741 = vmatprep.subr.mxu0 %v740
    %v742 = vand.u32 %v67, 4294901760
    %v743 = vsub.f32 %v67, %v742
    %v744 = vand.u32 %v743, 4294901760
    %v745 = vsub.f32 %v743, %v744
    %v746 = vand.u32 %v745, 4294901760
    %747 = vmatpush1.msra.mxu0 %v746
    %748 = vmatprep.subr.mxu0 0.0
    %749 = vmatpush1.msra.mxu0 0.0
    %750 = vmatprep.subr.mxu0 0.0
    %751 = vmatpush1.msra.mxu0 0.0
    %752 = vmatprep.subr.mxu0 0.0
    %753 = vmatpush1.msra.mxu0 0.0
    %754 = vmatprep.subr.mxu0 0.0
    %755 = vmatpush1.msra.mxu0 0.0
    %756 = vmatprep.subr.mxu0 0.0
    %757 = vmatpush1.msra.mxu0 0.0
    %758 = vmatprep.subr.mxu0 0.0
    %759 = vmatpush1.msra.mxu0 0.0
    %760 = vmatprep.subr.mxu0 0.0
    %761 = vmatpush1.msra.mxu0 0.0
    %762 = vmatprep.subr.mxu0 0.0
    %763 = vmatpush1.msra.mxu0 0.0
    %764 = vmatprep.subr.mxu0 0.0
    %765 = vmatpush1.msra.mxu0 0.0
    %766 = vmatprep.subr.mxu0 0.0
    %767 = vmatpush1.msra.mxu0 0.0
    %768 = vmatprep.subr.mxu0 0.0
    %769 = vmatpush1.msra.mxu0 0.0
    %770 = vmatprep.subr.mxu0 0.0
    %771 = vmatpush1.msra.mxu0 0.0
    %772 = vmatprep.subr.mxu0 0.0
    %773 = vmatpush1.msra.mxu0 0.0
    %774 = vmatprep.subr.mxu0 0.0
    %775 = vmatpush1.msra.mxu0 0.0
    %776 = vmatprep.subr.mxu0 0.0
    %777 = vmatpush1.msra.mxu0 0.0
    %778 = vmatprep.subr.mxu0 0.0
    %779 = vmatpush1.msra.mxu0 0.0
    %780 = vmatprep.subr.mxu0 0.0
    %781 = vmatpush1.msra.mxu0 0.0
    %782 = vmatprep.subr.mxu0 0.0
    %783 = vmatpush1.msra.mxu0 0.0
    %784 = vmatprep.subr.mxu0 0.0
    %785 = vmatpush1.msra.mxu0 0.0
    %786 = vmatprep.subr.mxu0 0.0
    %787 = vmatpush1.msra.mxu0 0.0
    %788 = vmatprep.subr.mxu0 0.0
    %789 = vmatpush1.msra.mxu0 0.0
    %790 = vmatprep.subr.mxu0 0.0
    %791 = vmatpush1.msra.mxu0 0.0
    %792 = vmatprep.subr.mxu0 0.0
    %793 = vmatpush1.msra.mxu0 0.0
    %794 = vmatprep.subr.mxu0 0.0
    %795 = vmatpush1.msra.mxu0 0.0
    %796 = vmatprep.subr.mxu0 0.0
    %797 = vmatpush1.msra.mxu0 0.0
    %798 = vmatprep.subr.mxu0 0.0
    %799 = vmatpush1.msra.mxu0 0.0
    %800 = vmatprep.subr.mxu0 0.0
    %801 = vmatpush1.msra.mxu0 0.0
    %802 = vmatprep.subr.mxu0 0.0
    %803 = vmatpush1.msra.mxu0 0.0
    %804 = vmatprep.mubr.f32.mxu0 0.0
    %v805 = vand.u32 %v71, 4294901760
    %806 = vmatmul.mubr.f32.gmra.mrb[0].mxu0 %v805
    %v807 = vpop.f32.mrb[0].mxu0
    %v808 = vadd.f32 %v696, %v807
    %v809 = vpop.f32.mrb[0].mxu0
    %v810 = vadd.f32 %v698, %v809
    %811 = vdwg.mxu0
    %v812 = vand.u32 %v56, 4294901760
    %v813 = vsub.f32 %v56, %v812
    %814 = vmatprep.subr.mxu0 %v813
    %v815 = vand.u32 %v55, 4294901760
    %v816 = vsub.f32 %v55, %v815
    %817 = vmatpush1.msra.mxu0 %v816
    %v818 = vand.u32 %v60, 4294901760
    %v819 = vsub.f32 %v60, %v818
    %820 = vmatprep.subr.mxu0 %v819
    %v821 = vand.u32 %v59, 4294901760
    %v822 = vsub.f32 %v59, %v821
    %823 = vmatpush1.msra.mxu0 %v822
    %v824 = vand.u32 %v64, 4294901760
    %v825 = vsub.f32 %v64, %v824
    %826 = vmatprep.subr.mxu0 %v825
    %v827 = vand.u32 %v63, 4294901760
    %v828 = vsub.f32 %v63, %v827
    %829 = vmatpush1.msra.mxu0 %v828
    %v830 = vand.u32 %v68, 4294901760
    %v831 = vsub.f32 %v68, %v830
    %832 = vmatprep.subr.mxu0 %v831
    %v833 = vand.u32 %v67, 4294901760
    %v834 = vsub.f32 %v67, %v833
    %835 = vmatpush1.msra.mxu0 %v834
    %836 = vmatprep.subr.mxu0 0.0
    %837 = vmatpush1.msra.mxu0 0.0
    %838 = vmatprep.subr.mxu0 0.0
    %839 = vmatpush1.msra.mxu0 0.0
    %840 = vmatprep.subr.mxu0 0.0
    %841 = vmatpush1.msra.mxu0 0.0
    %842 = vmatprep.subr.mxu0 0.0
    %843 = vmatpush1.msra.mxu0 0.0
    %844 = vmatprep.subr.mxu0 0.0
    %845 = vmatpush1.msra.mxu0 0.0
    %846 = vmatprep.subr.mxu0 0.0
    %847 = vmatpush1.msra.mxu0 0.0
    %848 = vmatprep.subr.mxu0 0.0
    %849 = vmatpush1.msra.mxu0 0.0
    %850 = vmatprep.subr.mxu0 0.0
    %851 = vmatpush1.msra.mxu0 0.0
    %852 = vmatprep.subr.mxu0 0.0
    %853 = vmatpush1.msra.mxu0 0.0
    %854 = vmatprep.subr.mxu0 0.0
    %855 = vmatpush1.msra.mxu0 0.0
    %856 = vmatprep.subr.mxu0 0.0
    %857 = vmatpush1.msra.mxu0 0.0
    %858 = vmatprep.subr.mxu0 0.0
    %859 = vmatpush1.msra.mxu0 0.0
    %860 = vmatprep.subr.mxu0 0.0
    %861 = vmatpush1.msra.mxu0 0.0
    %862 = vmatprep.subr.mxu0 0.0
    %863 = vmatpush1.msra.mxu0 0.0
    %864 = vmatprep.subr.mxu0 0.0
    %865 = vmatpush1.msra.mxu0 0.0
    %866 = vmatprep.subr.mxu0 0.0
    %867 = vmatpush1.msra.mxu0 0.0
    %868 = vmatprep.subr.mxu0 0.0
    %869 = vmatpush1.msra.mxu0 0.0
    %870 = vmatprep.subr.mxu0 0.0
    %871 = vmatpush1.msra.mxu0 0.0
    %872 = vmatprep.subr.mxu0 0.0
    %873 = vmatpush1.msra.mxu0 0.0
    %874 = vmatprep.subr.mxu0 0.0
    %875 = vmatpush1.msra.mxu0 0.0
    %876 = vmatprep.subr.mxu0 0.0
    %877 = vmatpush1.msra.mxu0 0.0
    %878 = vmatprep.subr.mxu0 0.0
    %879 = vmatpush1.msra.mxu0 0.0
    %880 = vmatprep.subr.mxu0 0.0
    %881 = vmatpush1.msra.mxu0 0.0
    %882 = vmatprep.subr.mxu0 0.0
    %883 = vmatpush1.msra.mxu0 0.0
    %884 = vmatprep.subr.mxu0 0.0
    %885 = vmatpush1.msra.mxu0 0.0
    %886 = vmatprep.subr.mxu0 0.0
    %887 = vmatpush1.msra.mxu0 0.0
    %888 = vmatprep.subr.mxu0 0.0
    %889 = vmatpush1.msra.mxu0 0.0
    %890 = vmatprep.subr.mxu0 0.0
    %891 = vmatpush1.msra.mxu0 0.0
    %892 = vmatprep.mubr.f32.mxu0 0.0
    %v893 = vand.u32 %v71, 4294901760
    %v894 = vsub.f32 %v71, %v893
    %895 = vmatmul.mubr.f32.gmra.mrb[0].mxu0 %v894
    %v896 = vpop.f32.mrb[0].mxu0
    %v897 = vadd.f32 %v808, %v896
    %v898 = vpop.f32.mrb[0].mxu0
    %v899 = vadd.f32 %v810, %v898
    %900 = vdwg.mxu0
    %v901 = vand.u32 %v56, 4294901760
    %902 = vmatprep.subr.mxu0 %v901
    %v903 = vand.u32 %v55, 4294901760
    %904 = vmatpush1.msra.mxu0 %v903
    %v905 = vand.u32 %v60, 4294901760
    %906 = vmatprep.subr.mxu0 %v905
    %v907 = vand.u32 %v59, 4294901760
    %908 = vmatpush1.msra.mxu0 %v907
    %v909 = vand.u32 %v64, 4294901760
    %910 = vmatprep.subr.mxu0 %v909
    %v911 = vand.u32 %v63, 4294901760
    %912 = vmatpush1.msra.mxu0 %v911
    %v913 = vand.u32 %v68, 4294901760
    %914 = vmatprep.subr.mxu0 %v913
    %v915 = vand.u32 %v67, 4294901760
    %916 = vmatpush1.msra.mxu0 %v915
    %917 = vmatprep.subr.mxu0 0.0
    %918 = vmatpush1.msra.mxu0 0.0
    %919 = vmatprep.subr.mxu0 0.0
    %920 = vmatpush1.msra.mxu0 0.0
    %921 = vmatprep.subr.mxu0 0.0
    %922 = vmatpush1.msra.mxu0 0.0
    %923 = vmatprep.subr.mxu0 0.0
    %924 = vmatpush1.msra.mxu0 0.0
    %925 = vmatprep.subr.mxu0 0.0
    %926 = vmatpush1.msra.mxu0 0.0
    %927 = vmatprep.subr.mxu0 0.0
    %928 = vmatpush1.msra.mxu0 0.0
    %929 = vmatprep.subr.mxu0 0.0
    %930 = vmatpush1.msra.mxu0 0.0
    %931 = vmatprep.subr.mxu0 0.0
    %932 = vmatpush1.msra.mxu0 0.0
    %933 = vmatprep.subr.mxu0 0.0
    %934 = vmatpush1.msra.mxu0 0.0
    %935 = vmatprep.subr.mxu0 0.0
    %936 = vmatpush1.msra.mxu0 0.0
    %937 = vmatprep.subr.mxu0 0.0
    %938 = vmatpush1.msra.mxu0 0.0
    %939 = vmatprep.subr.mxu0 0.0
    %940 = vmatpush1.msra.mxu0 0.0
    %941 = vmatprep.subr.mxu0 0.0
    %942 = vmatpush1.msra.mxu0 0.0
    %943 = vmatprep.subr.mxu0 0.0
    %944 = vmatpush1.msra.mxu0 0.0
    %945 = vmatprep.subr.mxu0 0.0
    %946 = vmatpush1.msra.mxu0 0.0
    %947 = vmatprep.subr.mxu0 0.0
    %948 = vmatpush1.msra.mxu0 0.0
    %949 = vmatprep.subr.mxu0 0.0
    %950 = vmatpush1.msra.mxu0 0.0
    %951 = vmatprep.subr.mxu0 0.0
    %952 = vmatpush1.msra.mxu0 0.0
    %953 = vmatprep.subr.mxu0 0.0
    %954 = vmatpush1.msra.mxu0 0.0
    %955 = vmatprep.subr.mxu0 0.0
    %956 = vmatpush1.msra.mxu0 0.0
    %957 = vmatprep.subr.mxu0 0.0
    %958 = vmatpush1.msra.mxu0 0.0
    %959 = vmatprep.subr.mxu0 0.0
    %960 = vmatpush1.msra.mxu0 0.0
    %961 = vmatprep.subr.mxu0 0.0
    %962 = vmatpush1.msra.mxu0 0.0
    %963 = vmatprep.subr.mxu0 0.0
    %964 = vmatpush1.msra.mxu0 0.0
    %965 = vmatprep.subr.mxu0 0.0
    %966 = vmatpush1.msra.mxu0 0.0
    %967 = vmatprep.subr.mxu0 0.0
    %968 = vmatpush1.msra.mxu0 0.0
    %969 = vmatprep.subr.mxu0 0.0
    %970 = vmatpush1.msra.mxu0 0.0
    %971 = vmatprep.subr.mxu0 0.0
    %972 = vmatpush1.msra.mxu0 0.0
    %973 = vmatprep.mubr.f32.mxu0 0.0
    %v974 = vand.u32 %v71, 4294901760
    %v975 = vsub.f32 %v71, %v974
    %v976 = vand.u32 %v975, 4294901760
    %977 = vmatmul.mubr.f32.gmra.mrb[0].mxu0 %v976
    %v978 = vpop.f32.mrb[0].mxu0
    %v979 = vadd.f32 %v897, %v978
    %v980 = vpop.f32.mrb[0].mxu0
    %v981 = vadd.f32 %v899, %v980
    %982 = vdwg.mxu0
    %v983 = vand.u32 %v56, 4294901760
    %v984 = vsub.f32 %v56, %v983
    %v985 = vand.u32 %v984, 4294901760
    %986 = vmatprep.subr.mxu0 %v985
    %v987 = vand.u32 %v55, 4294901760
    %v988 = vsub.f32 %v55, %v987
    %v989 = vand.u32 %v988, 4294901760
    %990 = vmatpush1.msra.mxu0 %v989
    %v991 = vand.u32 %v60, 4294901760
    %v992 = vsub.f32 %v60, %v991
    %v993 = vand.u32 %v992, 4294901760
    %994 = vmatprep.subr.mxu0 %v993
    %v995 = vand.u32 %v59, 4294901760
    %v996 = vsub.f32 %v59, %v995
    %v997 = vand.u32 %v996, 4294901760
    %998 = vmatpush1.msra.mxu0 %v997
    %v999 = vand.u32 %v64, 4294901760
    %v1000 = vsub.f32 %v64, %v999
    %v1001 = vand.u32 %v1000, 4294901760
    %1002 = vmatprep.subr.mxu0 %v1001
    %v1003 = vand.u32 %v63, 4294901760
    %v1004 = vsub.f32 %v63, %v1003
    %v1005 = vand.u32 %v1004, 4294901760
    %1006 = vmatpush1.msra.mxu0 %v1005
    %v1007 = vand.u32 %v68, 4294901760
    %v1008 = vsub.f32 %v68, %v1007
    %v1009 = vand.u32 %v1008, 4294901760
    %1010 = vmatprep.subr.mxu0 %v1009
    %v1011 = vand.u32 %v67, 4294901760
    %v1012 = vsub.f32 %v67, %v1011
    %v1013 = vand.u32 %v1012, 4294901760
    %1014 = vmatpush1.msra.mxu0 %v1013
    %1015 = vmatprep.subr.mxu0 0.0
    %1016 = vmatpush1.msra.mxu0 0.0
    %1017 = vmatprep.subr.mxu0 0.0
    %1018 = vmatpush1.msra.mxu0 0.0
    %1019 = vmatprep.subr.mxu0 0.0
    %1020 = vmatpush1.msra.mxu0 0.0
    %1021 = vmatprep.subr.mxu0 0.0
    %1022 = vmatpush1.msra.mxu0 0.0
    %1023 = vmatprep.subr.mxu0 0.0
    %1024 = vmatpush1.msra.mxu0 0.0
    %1025 = vmatprep.subr.mxu0 0.0
    %1026 = vmatpush1.msra.mxu0 0.0
    %1027 = vmatprep.subr.mxu0 0.0
    %1028 = vmatpush1.msra.mxu0 0.0
    %1029 = vmatprep.subr.mxu0 0.0
    %1030 = vmatpush1.msra.mxu0 0.0
    %1031 = vmatprep.subr.mxu0 0.0
    %1032 = vmatpush1.msra.mxu0 0.0
    %1033 = vmatprep.subr.mxu0 0.0
    %1034 = vmatpush1.msra.mxu0 0.0
    %1035 = vmatprep.subr.mxu0 0.0
    %1036 = vmatpush1.msra.mxu0 0.0
    %1037 = vmatprep.subr.mxu0 0.0
    %1038 = vmatpush1.msra.mxu0 0.0
    %1039 = vmatprep.subr.mxu0 0.0
    %1040 = vmatpush1.msra.mxu0 0.0
    %1041 = vmatprep.subr.mxu0 0.0
    %1042 = vmatpush1.msra.mxu0 0.0
    %1043 = vmatprep.subr.mxu0 0.0
    %1044 = vmatpush1.msra.mxu0 0.0
    %1045 = vmatprep.subr.mxu0 0.0
    %1046 = vmatpush1.msra.mxu0 0.0
    %1047 = vmatprep.subr.mxu0 0.0
    %1048 = vmatpush1.msra.mxu0 0.0
    %1049 = vmatprep.subr.mxu0 0.0
    %1050 = vmatpush1.msra.mxu0 0.0
    %1051 = vmatprep.subr.mxu0 0.0
    %1052 = vmatpush1.msra.mxu0 0.0
    %1053 = vmatprep.subr.mxu0 0.0
    %1054 = vmatpush1.msra.mxu0 0.0
    %1055 = vmatprep.subr.mxu0 0.0
    %1056 = vmatpush1.msra.mxu0 0.0
    %1057 = vmatprep.subr.mxu0 0.0
    %1058 = vmatpush1.msra.mxu0 0.0
    %1059 = vmatprep.subr.mxu0 0.0
    %1060 = vmatpush1.msra.mxu0 0.0
    %1061 = vmatprep.subr.mxu0 0.0
    %1062 = vmatpush1.msra.mxu0 0.0
    %1063 = vmatprep.subr.mxu0 0.0
    %1064 = vmatpush1.msra.mxu0 0.0
    %1065 = vmatprep.subr.mxu0 0.0
    %1066 = vmatpush1.msra.mxu0 0.0
    %1067 = vmatprep.subr.mxu0 0.0
    %1068 = vmatpush1.msra.mxu0 0.0
    %1069 = vmatprep.subr.mxu0 0.0
    %1070 = vmatpush1.msra.mxu0 0.0
    %1071 = vmatprep.mubr.f32.mxu0 0.0
    %v1072 = vand.u32 %v71, 4294901760
    %1073 = vmatmul.mubr.f32.gmra.mrb[0].mxu0 %v1072
    %v1074 = vpop.f32.mrb[0].mxu0
    %v1075 = vadd.f32 %v979, %v1074
    %v1076 = vpop.f32.mrb[0].mxu0
    %v1077 = vadd.f32 %v981, %v1076
    %1078 = vdwg.mxu0
    %v1079 = vand.u32 %v56, 4294901760
    %1080 = vmatprep.subr.mxu0 %v1079
    %v1081 = vand.u32 %v55, 4294901760
    %1082 = vmatpush1.msra.mxu0 %v1081
    %v1083 = vand.u32 %v60, 4294901760
    %1084 = vmatprep.subr.mxu0 %v1083
    %v1085 = vand.u32 %v59, 4294901760
    %1086 = vmatpush1.msra.mxu0 %v1085
    %v1087 = vand.u32 %v64, 4294901760
    %1088 = vmatprep.subr.mxu0 %v1087
    %v1089 = vand.u32 %v63, 4294901760
    %1090 = vmatpush1.msra.mxu0 %v1089
    %v1091 = vand.u32 %v68, 4294901760
    %1092 = vmatprep.subr.mxu0 %v1091
    %v1093 = vand.u32 %v67, 4294901760
    %1094 = vmatpush1.msra.mxu0 %v1093
    %1095 = vmatprep.subr.mxu0 0.0
    %1096 = vmatpush1.msra.mxu0 0.0
    %1097 = vmatprep.subr.mxu0 0.0
    %1098 = vmatpush1.msra.mxu0 0.0
    %1099 = vmatprep.subr.mxu0 0.0
    %1100 = vmatpush1.msra.mxu0 0.0
    %1101 = vmatprep.subr.mxu0 0.0
    %1102 = vmatpush1.msra.mxu0 0.0
    %1103 = vmatprep.subr.mxu0 0.0
    %1104 = vmatpush1.msra.mxu0 0.0
    %1105 = vmatprep.subr.mxu0 0.0
    %1106 = vmatpush1.msra.mxu0 0.0
    %1107 = vmatprep.subr.mxu0 0.0
    %1108 = vmatpush1.msra.mxu0 0.0
    %1109 = vmatprep.subr.mxu0 0.0
    %1110 = vmatpush1.msra.mxu0 0.0
    %1111 = vmatprep.subr.mxu0 0.0
    %1112 = vmatpush1.msra.mxu0 0.0
    %1113 = vmatprep.subr.mxu0 0.0
    %1114 = vmatpush1.msra.mxu0 0.0
    %1115 = vmatprep.subr.mxu0 0.0
    %1116 = vmatpush1.msra.mxu0 0.0
    %1117 = vmatprep.subr.mxu0 0.0
    %1118 = vmatpush1.msra.mxu0 0.0
    %1119 = vmatprep.subr.mxu0 0.0
    %1120 = vmatpush1.msra.mxu0 0.0
    %1121 = vmatprep.subr.mxu0 0.0
    %1122 = vmatpush1.msra.mxu0 0.0
    %1123 = vmatprep.subr.mxu0 0.0
    %1124 = vmatpush1.msra.mxu0 0.0
    %1125 = vmatprep.subr.mxu0 0.0
    %1126 = vmatpush1.msra.mxu0 0.0
    %1127 = vmatprep.subr.mxu0 0.0
    %1128 = vmatpush1.msra.mxu0 0.0
    %1129 = vmatprep.subr.mxu0 0.0
    %1130 = vmatpush1.msra.mxu0 0.0
    %1131 = vmatprep.subr.mxu0 0.0
    %1132 = vmatpush1.msra.mxu0 0.0
    %1133 = vmatprep.subr.mxu0 0.0
    %1134 = vmatpush1.msra.mxu0 0.0
    %1135 = vmatprep.subr.mxu0 0.0
    %1136 = vmatpush1.msra.mxu0 0.0
    %1137 = vmatprep.subr.mxu0 0.0
    %1138 = vmatpush1.msra.mxu0 0.0
    %1139 = vmatprep.subr.mxu0 0.0
    %1140 = vmatpush1.msra.mxu0 0.0
    %1141 = vmatprep.subr.mxu0 0.0
    %1142 = vmatpush1.msra.mxu0 0.0
    %1143 = vmatprep.subr.mxu0 0.0
    %1144 = vmatpush1.msra.mxu0 0.0
    %1145 = vmatprep.subr.mxu0 0.0
    %1146 = vmatpush1.msra.mxu0 0.0
    %1147 = vmatprep.subr.mxu0 0.0
    %1148 = vmatpush1.msra.mxu0 0.0
    %1149 = vmatprep.subr.mxu0 0.0
    %1150 = vmatpush1.msra.mxu0 0.0
    %1151 = vmatprep.mubr.f32.mxu0 0.0
    %v1152 = vand.u32 %v71, 4294901760
    %1153 = vmatmul.mubr.f32.gmra.mrb[0].mxu0 %v1152
    %v1154 = vpop.f32.mrb[0].mxu0
    %v1155 = vadd.f32 %v1075, %v1154
    %v1156 = vpop.f32.mrb[0].mxu0
    %v1157 = vadd.f32 %v1077, %v1156
    %1158 = vdwg.mxu0
    %v1159 = vld [vmem:[#allocation7] sm:$0xff]
    %v1160 = vsub.f32 %v1159, %v1155
    %v1161 = vmul.f32 %v1157, %v1160
    %v1162 = vmul.f32 %v1161, 0.5
    %v1163 = vtanh.pop %v1162
    %v1164 = vmul.f32 %v1163, 0.5
    %v1165 = vadd.f32 %v1164, 0.5
    %v1166 = vsub.f32 %v614, %v612
    %v1167 = vmul.f32 %v1166, %v1165
    %v1168 = vadd.f32 %v612, %v1167
    %1169 = vst [vmem:[#allocation8] sm:$0xff] %v1168
    // Predicated region
    $region26: #{tpu_custom_call.1} parent=1 // pred_check
      _
    $region27: #{tpu_custom_call.1} parent=1 // pred_check_branch
      %1171 = sbr.rel (0) target = $region29
    $region28: #{tpu_custom_call.1} parent=1 // pred_region
      %s1173 = ssub.s32 128, 128
      %1174 = vsyncadd [#allocation4], %s1173
      %s1176 = sshll.u32 [#allocation8], 4
      %s1177 = int_to_ptr.vmem [resolvable:$true] %s1176
      %1179 = dma.vmem_to_hbm [thread:$0]  %s1177, 128, %s3, [#allocation4]
    $region29: #{tpu_custom_call.1} parent=1 // pred_fallthru
      _
    // Predicated region
    $region30: #{tpu_custom_call.1} parent=1 // pred_check
      _
    $region31: #{tpu_custom_call.1} parent=1 // pred_check_branch
      %1181 = sbr.rel (0) target = $region33
    $region32: #{tpu_custom_call.1} parent=1 // pred_region
      %1182 = dma.done [#allocation4], 128
    $region33: #{tpu_custom_call.1} parent=1 // pred_fallthru
      _
    %1183 = vsyncpa [#allocation3], 1
    %1184 = vsyncpa [#allocation6], 1
    %1185 = vsyncpa [#allocation4], 1

</llo_original>
